<compile_context>
chip_gen: v5e
topology: v5e:2x2
jax: 0.10.0
libtpu: 0.0.40
codegen_flags: <defaults>
</compile_context>

<pallas_src>
import math

import jax
import jax.numpy as jnp
import numpy as np
from jax import lax
from jax.experimental import pallas as pl
from jax.experimental.pallas import tpu as pltpu


def _round_up(x, m):
    return ((x + m - 1) // m) * m


def _pick_tile(padded_dim, candidates=(512, 256, 128)):
    """Largest candidate tile that divides the (already lane-padded) dim."""
    for c in candidates:
        if padded_dim >= c and padded_dim % c == 0:
            return c
    return padded_dim


def _filter_linear_kernel(x_ref, w_ref, f_ref, b_ref, o_ref, acc_ref):
    """One (tm, tn) output tile; grid axis 2 reduces over K.

    y_tile += x_tile @ (filter_tile * W_tile).T   (MXU, f32 accumulate)
    """
    k = pl.program_id(2)

    @pl.when(k == 0)
    def _init():
        acc_ref[...] = jnp.zeros_like(acc_ref)

    # FilterLinear's constant 0/1 mask, applied on the VPU (free under the
    # MXU matmul of the same tile).
    w_eff = f_ref[...] * w_ref[...]                      # (tn, tk)

    # x (tm, tk) contracted against w_eff's in_features axis == x @ w_eff.T,
    # without any transpose pass.
    acc_ref[...] += lax.dot_general(
        x_ref[...], w_eff, (((1,), (1,)), ((), ())),
        preferred_element_type=jnp.float32)

    @pl.when(k == pl.num_programs(2) - 1)
    def _finalize():
        o_ref[...] = (acc_ref[...] + b_ref[...]).astype(o_ref.dtype)


def filter_linear(x, weight, filter_square_matrix, bias=None):
    """Pallas-TPU equivalent of FilterLinear.forward.

    x:      (..., in_features)
    weight: (out_features, in_features)
    filter_square_matrix: (out_features, in_features), 0/1 entries
    bias:   (out_features,) or None
    returns (..., out_features)
    """
    f32 = jnp.float32
    orig_dtype = x.dtype
    out_features, in_features = weight.shape

    lead = x.shape[:-1]
    M = int(np.prod(lead)) if lead else 1
    x2 = jnp.reshape(x, (M, in_features)).astype(f32)
    w = weight.astype(f32)
    f = filter_square_matrix.astype(f32)
    b = jnp.zeros((out_features,), f32) if bias is None else bias.astype(f32)

    # Pad to TPU-friendly sizes: sublane multiple on M, lane (128) multiples
    # on K and N (lane-dense, unmasked output stores).
    Kp = _round_up(in_features, 128)
    Np = _round_up(out_features, 128)
    Mp = _round_up(M, 8)
    if Mp > 128:
        tm = 128
        Mp = _round_up(M, tm)
    else:
        tm = Mp
    tk = _pick_tile(Kp)
    tn = _pick_tile(Np)

    x_p = jnp.zeros((Mp, Kp), f32).at[:M, :in_features].set(x2)
    w_p = jnp.zeros((Np, Kp), f32).at[:out_features, :in_features].set(w)
    f_p = jnp.zeros((Np, Kp), f32).at[:out_features, :in_features].set(f)
    b_p = jnp.zeros((1, Np), f32).at[:, :out_features].set(b[None, :])

    grid = (Mp // tm, Np // tn, Kp // tk)

    out_p = pl.pallas_call(
        _filter_linear_kernel,
        out_shape=jax.ShapeDtypeStruct((Mp, Np), f32),
        grid_spec=pltpu.PrefetchScalarGridSpec(
            num_scalar_prefetch=0,
            grid=grid,
            in_specs=[
                pl.BlockSpec((tm, tk), lambda i, j, k: (i, k)),   # x
                pl.BlockSpec((tn, tk), lambda i, j, k: (j, k)),   # weight
                pl.BlockSpec((tn, tk), lambda i, j, k: (j, k)),   # filter mask
                pl.BlockSpec((1, tn), lambda i, j, k: (0, j)),    # bias row
            ],
            out_specs=pl.BlockSpec((tm, tn), lambda i, j, k: (i, j)),
            scratch_shapes=[pltpu.VMEM((tm, tn), jnp.float32)],
        ),
        compiler_params=pltpu.CompilerParams(
            dimension_semantics=("parallel", "parallel", "arbitrary")),
    )(x_p, w_p, f_p, b_p)

    out = out_p[:M, :out_features]
    return jnp.reshape(out, lead + (out_features,)).astype(orig_dtype)


def filter_linear_reference(x, weight, filter_square_matrix, bias=None):
    """Pure-JAX reference mirroring the PyTorch forward."""
    w_eff = filter_square_matrix * weight
    y = jnp.einsum('...k,nk->...n', x, w_eff,
                   precision=lax.Precision.HIGHEST)
    if bias is not None:
        y = y + bias
    return y


if __name__ == "__main__":
    root = jax.random.PRNGKey(0)
    k1, k2, k3, krest = jax.random.split(root, 4)

    # ---- Case 1: GRU-D-style use (square identity filter, small shapes) ----
    batch, in_features, out_features = 8, 16, 16
    stdv = 1.0 / math.sqrt(in_features)          # reset_parameters() init
    weight = jax.random.uniform(k1, (out_features, in_features), jnp.float32,
                                -stdv, stdv)
    bias = jax.random.uniform(k2, (out_features,), jnp.float32, -stdv, stdv)
    filt = jnp.eye(out_features, in_features, dtype=jnp.float32)
    x = jax.random.normal(k3, (batch, in_features), dtype=jnp.float32)

    y = jax.block_until_ready(filter_linear(x, weight, filt, bias))
    y_ref = filter_linear_reference(x, weight, filt, bias)
    assert y.shape == (batch, out_features)
    np.testing.assert_allclose(np.asarray(y), np.asarray(y_ref),
                               rtol=1e-4, atol=1e-4)

    # ---- Case 2: non-aligned dims, random 0/1 filter, multi-tile grid,
    #              extra leading batch dims, no bias ---------------------------
    B0, B1, K2, N2 = 4, 50, 300, 260
    ka, kb, kc = jax.random.split(krest, 3)
    w2 = jax.random.uniform(ka, (N2, K2), jnp.float32, -0.1, 0.1)
    f2 = (jax.random.uniform(kb, (N2, K2)) > 0.5).astype(jnp.float32)
    x2 = jax.random.normal(kc, (B0, B1, K2), dtype=jnp.float32)

    y2 = jax.block_until_ready(filter_linear(x2, w2, f2, bias=None))
    y2_ref = filter_linear_reference(x2, w2, f2, bias=None)
    assert y2.shape == (B0, B1, N2)
    np.testing.assert_allclose(np.asarray(y2), np.asarray(y2_ref),
                               rtol=5e-4, atol=5e-4)

    print("KERNEL_OK")
</pallas_src>

<mosaic_0001>
module attributes {stable_mosaic.version = 11 : i64} {
  func.func @_filter_linear_kernel(%arg0: i32, %arg1: i32, %arg2: i32, %arg3: memref<8x128xf32, #tpu.memory_space<vmem>>, %arg4: memref<128x128xf32, #tpu.memory_space<vmem>>, %arg5: memref<128x128xf32, #tpu.memory_space<vmem>>, %arg6: memref<1x128xf32, #tpu.memory_space<vmem>>, %arg7: memref<8x128xf32, #tpu.memory_space<vmem>>, %arg8: memref<8x128xf32, #tpu.memory_space<vmem>>) attributes {dimension_semantics = [#tpu.dimension_semantics<parallel>, #tpu.dimension_semantics<parallel>, #tpu.dimension_semantics<arbitrary>], iteration_bounds = array<i64: 1, 1, 1>, scalar_prefetch = 0 : i64, scratch_operands = 1 : i64, tpu.core_type = #tpu.core_type<tc>, window_params = [{transform_indices = @transform_0, window_bounds = array<i64: 8, 128>}, {transform_indices = @transform_1, window_bounds = array<i64: 128, 128>}, {transform_indices = @transform_2, window_bounds = array<i64: 128, 128>}, {transform_indices = @transform_3, window_bounds = array<i64: 1, 128>}, {transform_indices = @transform_4, window_bounds = array<i64: 8, 128>}]} {
    %c0_i32 = arith.constant 0 : i32
    %0 = arith.cmpi eq, %arg2, %c0_i32 : i32
    %1 = arith.extui %0 : i1 to i32
    %c0_i32_0 = arith.constant 0 : i32
    %2 = arith.cmpi ne, %1, %c0_i32_0 : i32
    scf.if %2 {
      %cst_12 = arith.constant 0.000000e+00 : f32
      %14 = vector.broadcast %cst_12 : f32 to vector<8x128xf32>
      %c0_13 = arith.constant 0 : index
      %c0_14 = arith.constant 0 : index
      %15 = vector.load %arg8[%c0_13, %c0_14] : memref<8x128xf32, #tpu.memory_space<vmem>>, vector<8x128xf32>
      tpu.vector_store %arg8[%c0_13, %c0_14], %14 {strides = array<i32>} : memref<8x128xf32, #tpu.memory_space<vmem>>, vector<8x128xf32>,
    } else {
    }
    %c0 = arith.constant 0 : index
    %c0_1 = arith.constant 0 : index
    %3 = vector.load %arg5[%c0, %c0_1] : memref<128x128xf32, #tpu.memory_space<vmem>>, vector<128x128xf32>
    %c0_2 = arith.constant 0 : index
    %c0_3 = arith.constant 0 : index
    %4 = vector.load %arg4[%c0_2, %c0_3] : memref<128x128xf32, #tpu.memory_space<vmem>>, vector<128x128xf32>
    %5 = arith.mulf %3, %4 : vector<128x128xf32>
    %c0_4 = arith.constant 0 : index
    %c0_5 = arith.constant 0 : index
    %6 = vector.load %arg8[%c0_4, %c0_5] : memref<8x128xf32, #tpu.memory_space<vmem>>, vector<8x128xf32>
    %c0_6 = arith.constant 0 : index
    %c0_7 = arith.constant 0 : index
    %7 = vector.load %arg3[%c0_6, %c0_7] : memref<8x128xf32, #tpu.memory_space<vmem>>, vector<8x128xf32>
    %cst = arith.constant dense<0.000000e+00> : vector<8x128xf32>
    %8 = tpu.matmul %7, %5, %cst {dimension_numbers = #tpu.dot_dimension_numbers<[1], [1], [0], [0], [0, 0, 1, 0], [], []>} : vector<8x128xf32>, vector<128x128xf32>, vector<8x128xf32> -> vector<8x128xf32>
    %9 = arith.addf %6, %8 : vector<8x128xf32>
    %c0_8 = arith.constant 0 : index
    %c0_9 = arith.constant 0 : index
    %10 = vector.load %arg8[%c0_8, %c0_9] : memref<8x128xf32, #tpu.memory_space<vmem>>, vector<8x128xf32>
    tpu.vector_store %arg8[%c0_8, %c0_9], %9 {strides = array<i32>} : memref<8x128xf32, #tpu.memory_space<vmem>>, vector<8x128xf32>,
    %c0_i32_10 = arith.constant 0 : i32
    %11 = arith.cmpi eq, %arg2, %c0_i32_10 : i32
    %12 = arith.extui %11 : i1 to i32
    %c0_i32_11 = arith.constant 0 : i32
    %13 = arith.cmpi ne, %12, %c0_i32_11 : i32
    scf.if %13 {
      %c0_12 = arith.constant 0 : index
      %c0_13 = arith.constant 0 : index
      %14 = vector.load %arg8[%c0_12, %c0_13] : memref<8x128xf32, #tpu.memory_space<vmem>>, vector<8x128xf32>
      %c0_14 = arith.constant 0 : index
      %c0_15 = arith.constant 0 : index
      %15 = vector.load %arg6[%c0_14, %c0_15] : memref<1x128xf32, #tpu.memory_space<vmem>>, vector<1x128xf32>
      %16 = vector.broadcast %15 : vector<1x128xf32> to vector<8x128xf32>
      %17 = arith.addf %14, %16 : vector<8x128xf32>
      %c0_16 = arith.constant 0 : index
      %c0_17 = arith.constant 0 : index
      %18 = vector.load %arg7[%c0_16, %c0_17] : memref<8x128xf32, #tpu.memory_space<vmem>>, vector<8x128xf32>
      tpu.vector_store %arg7[%c0_16, %c0_17], %17 {strides = array<i32>} : memref<8x128xf32, #tpu.memory_space<vmem>>, vector<8x128xf32>,
    } else {
    }
    return
  }
  func.func @transform_0(%arg0: i32, %arg1: i32, %arg2: i32) -> (i32, i32) {
    %c0_i32 = arith.constant 0 : i32
    return %arg0, %arg2 : i32, i32
  }
  func.func @transform_1(%arg0: i32, %arg1: i32, %arg2: i32) -> (i32, i32) {
    %c0_i32 = arith.constant 0 : i32
    return %arg1, %arg2 : i32, i32
  }
  func.func @transform_2(%arg0: i32, %arg1: i32, %arg2: i32) -> (i32, i32) {
    %c0_i32 = arith.constant 0 : i32
    return %arg1, %arg2 : i32, i32
  }
  func.func @transform_3(%arg0: i32, %arg1: i32, %arg2: i32) -> (i32, i32) {
    %c0_i32 = arith.constant 0 : i32
    %c0_i32_0 = arith.constant 0 : i32
    return %c0_i32, %arg1 : i32, i32
  }
  func.func @transform_4(%arg0: i32, %arg1: i32, %arg2: i32) -> (i32, i32) {
    %c0_i32 = arith.constant 0 : i32
    return %arg0, %arg1 : i32, i32
  }
}

</mosaic_0001>

<llo_original>
// kernel: tpu_custom_call.1
$region0: #{tpu_custom_call.1}
  #allocation0 [shape = 'u32[]', space=smem, size = 0x4, offset = 0x4, fixed_abs, tag = 'smem constant byte address 0x4 - core index']
  #allocation1 [shape = 'u32[72,128]{1,0:T(1,128)}', space=vmem, size = 0x9000, scoped, tag = 'internal scratch']
  #allocation2 [shape = 'f32[8,128]{1,0:T(8,128)}', space=vmem, size = 0x1000, scoped, tag = 'scratch operand']
  %s0 = inlined_call_operand.hbm [shape: f32[8,128], index: 0, kind: input, shape index: {}]
  %s1 = inlined_call_operand.hbm [shape: f32[128,128], index: 1, kind: input, shape index: {}]
  %s2 = inlined_call_operand.hbm [shape: f32[128,128], index: 2, kind: input, shape index: {}]
  %s3 = inlined_call_operand.vmem [shape: f32[1,128], index: 3, kind: input, shape index: {}]
  %s4 = inlined_call_operand.hbm [shape: f32[8,128], index: 4, kind: output, shape index: {}]
  %s5 = sld [smem:[#allocation0]]
  $region46: #{tpu_custom_call.1} parent=0
    _
  %s7 = ssub.s32 1, %s5
  %s8 = scalar_select 0, %s7, %s5
  $region1: #{tpu_custom_call.1} parent=0
    #allocation3 [shape = 'u8[4096]{0}', space=vmem, size = 0x1000, scoped, tag = 'input window, operand 0, single buffered']
    #allocation4 [shape = 's32[1]{0}', space=sflag, size = 0x4, scoped, tag = 'scoped memory for tpu_custom_call.1']
    #allocation5 [shape = 's32[1]{0}', space=sflag, size = 0x4, scoped, tag = 'scoped memory for tpu_custom_call.1']
    #allocation6 [shape = 'u8[65536]{0}', space=vmem, size = 0x10000, scoped, tag = 'input window, operand 1, single buffered']
    #allocation7 [shape = 's32[1]{0}', space=sflag, size = 0x4, scoped, tag = 'scoped memory for tpu_custom_call.1']
    #allocation8 [shape = 'u8[65536]{0}', space=vmem, size = 0x10000, scoped, tag = 'input window, operand 2, single buffered']
    #allocation9 [shape = 'u8[4096]{0}', space=vmem, size = 0x1000, scoped, tag = 'output window, operand 0, single buffered']
    %9 = vsyncpa [#allocation4], 0
    %10 = vsyncpa [#allocation7], 0
    %11 = vsyncpa [#allocation5], 0
    // Predicated region
    $region2: #{tpu_custom_call.1} parent=1 // pred_check
      _
    $region3: #{tpu_custom_call.1} parent=1 // pred_check_branch
      %13 = sbr.rel (0) target = $region5
    $region4: #{tpu_custom_call.1} parent=1 // pred_region
      %15 = vsyncadd [#allocation4], 0
      %s17 = sshll.u32 %s0, 4
      %s18 = int_to_ptr.hbm [resolvable:$true] %s17
      %s19 = sshll.u32 [#allocation3], 4
      %s20 = int_to_ptr.vmem [resolvable:$true] %s19
      %22 = dma.hbm_to_vmem [thread:$0]  %s18, 128, %s20, [#allocation4]
    $region5: #{tpu_custom_call.1} parent=1 // pred_fallthru
      _
    // Predicated region
    $region6: #{tpu_custom_call.1} parent=1 // pred_check
      _
    $region7: #{tpu_custom_call.1} parent=1 // pred_check_branch
      %24 = sbr.rel (0) target = $region9
    $region8: #{tpu_custom_call.1} parent=1 // pred_region
      %26 = vsyncadd [#allocation7], 0
      %s27 = sshll.u32 %s1, 4
      %s28 = int_to_ptr.hbm [resolvable:$true] %s27
      %s29 = sshll.u32 [#allocation6], 4
      %s30 = int_to_ptr.vmem [resolvable:$true] %s29
      %35 = dma.hbm_to_vmem [thread:$0]  %s28, 2048, %s30, [#allocation7], 128, 128, 8
    $region9: #{tpu_custom_call.1} parent=1 // pred_fallthru
      _
    // Predicated region
    $region10: #{tpu_custom_call.1} parent=1 // pred_check
      _
    $region11: #{tpu_custom_call.1} parent=1 // pred_check_branch
      %37 = sbr.rel (0) target = $region13
    $region12: #{tpu_custom_call.1} parent=1 // pred_region
      %39 = vsyncadd [#allocation7], 0
      %s40 = sshll.u32 %s2, 4
      %s41 = int_to_ptr.hbm [resolvable:$true] %s40
      %s42 = sshll.u32 [#allocation8], 4
      %s43 = int_to_ptr.vmem [resolvable:$true] %s42
      %48 = dma.hbm_to_vmem [thread:$0]  %s41, 2048, %s43, [#allocation7], 128, 128, 8
    $region13: #{tpu_custom_call.1} parent=1 // pred_fallthru
      _
    // Predicated region
    $region14: #{tpu_custom_call.1} parent=1 // pred_check
      _
    $region15: #{tpu_custom_call.1} parent=1 // pred_check_branch
      %50 = sbr.rel (0) target = $region17
    $region16: #{tpu_custom_call.1} parent=1 // pred_region
      _
    $region17: #{tpu_custom_call.1} parent=1 // pred_fallthru
      _
    // Predicated region
    $region18: #{tpu_custom_call.1} parent=1 // pred_check
      _
    $region19: #{tpu_custom_call.1} parent=1 // pred_check_branch
      %52 = sbr.rel (0) target = $region21
    $region20: #{tpu_custom_call.1} parent=1 // pred_region
      %54 = dma.done [#allocation4], 128
    $region21: #{tpu_custom_call.1} parent=1 // pred_fallthru
      _
    // Predicated region
    $region22: #{tpu_custom_call.1} parent=1 // pred_check
      _
    $region23: #{tpu_custom_call.1} parent=1 // pred_check_branch
      %56 = sbr.rel (0) target = $region25
    $region24: #{tpu_custom_call.1} parent=1 // pred_region
      %58 = dma.done [#allocation7], 2048
    $region25: #{tpu_custom_call.1} parent=1 // pred_fallthru
      _
    // Predicated region
    $region26: #{tpu_custom_call.1} parent=1 // pred_check
      _
    $region27: #{tpu_custom_call.1} parent=1 // pred_check_branch
      %60 = sbr.rel (0) target = $region29
    $region28: #{tpu_custom_call.1} parent=1 // pred_region
      %62 = dma.done [#allocation7], 2048
    $region29: #{tpu_custom_call.1} parent=1 // pred_fallthru
      _
    %p63 = scmp.eq.s32.totalorder 0, 0
    // Predicated region
    $region30: #{tpu_custom_call.1} parent=1 // pred_check
      %p64 = pneg %p63
    $region31: #{tpu_custom_call.1} parent=1 // pred_check_branch
      %66 = sbr.rel (%p64) target = $region33
    $region32: #{tpu_custom_call.1} parent=1 // pred_region
      %67 = vst [vmem:[#allocation2] sm:$0xff] 0.0
    $region33: #{tpu_custom_call.1} parent=1 // pred_fallthru
      _
    %v68 = vld [vmem:[#allocation8] sm:$0xff]
    %v69 = vld [vmem:[#allocation8 + $0x8] sm:$0xff]
    %v70 = vld [vmem:[#allocation8 + $0x10] sm:$0xff]
    %v71 = vld [vmem:[#allocation8 + $0x18] sm:$0xff]
    %v72 = vld [vmem:[#allocation8 + $0x20] sm:$0xff]
    %v73 = vld [vmem:[#allocation8 + $0x28] sm:$0xff]
    %v74 = vld [vmem:[#allocation8 + $0x30] sm:$0xff]
    %v75 = vld [vmem:[#allocation8 + $0x38] sm:$0xff]
    %v76 = vld [vmem:[#allocation8 + $0x40] sm:$0xff]
    %v77 = vld [vmem:[#allocation8 + $0x48] sm:$0xff]
    %v78 = vld [vmem:[#allocation8 + $0x50] sm:$0xff]
    %v79 = vld [vmem:[#allocation8 + $0x58] sm:$0xff]
    %v80 = vld [vmem:[#allocation8 + $0x60] sm:$0xff]
    %v81 = vld [vmem:[#allocation8 + $0x68] sm:$0xff]
    %v82 = vld [vmem:[#allocation8 + $0x70] sm:$0xff]
    %v83 = vld [vmem:[#allocation8 + $0x78] sm:$0xff]
    %v84 = vld [vmem:[#allocation6] sm:$0xff]
    %v85 = vld [vmem:[#allocation6 + $0x8] sm:$0xff]
    %v86 = vld [vmem:[#allocation6 + $0x10] sm:$0xff]
    %v87 = vld [vmem:[#allocation6 + $0x18] sm:$0xff]
    %v88 = vld [vmem:[#allocation6 + $0x20] sm:$0xff]
    %v89 = vld [vmem:[#allocation6 + $0x28] sm:$0xff]
    %v90 = vld [vmem:[#allocation6 + $0x30] sm:$0xff]
    %v91 = vld [vmem:[#allocation6 + $0x38] sm:$0xff]
    %v92 = vld [vmem:[#allocation6 + $0x40] sm:$0xff]
    %v93 = vld [vmem:[#allocation6 + $0x48] sm:$0xff]
    %v94 = vld [vmem:[#allocation6 + $0x50] sm:$0xff]
    %v95 = vld [vmem:[#allocation6 + $0x58] sm:$0xff]
    %v96 = vld [vmem:[#allocation6 + $0x60] sm:$0xff]
    %v97 = vld [vmem:[#allocation6 + $0x68] sm:$0xff]
    %v98 = vld [vmem:[#allocation6 + $0x70] sm:$0xff]
    %v99 = vld [vmem:[#allocation6 + $0x78] sm:$0xff]
    %v100 = vmul.f32 %v68, %v84
    %v101 = vmul.f32 %v69, %v85
    %v102 = vmul.f32 %v70, %v86
    %v103 = vmul.f32 %v71, %v87
    %v104 = vmul.f32 %v72, %v88
    %v105 = vmul.f32 %v73, %v89
    %v106 = vmul.f32 %v74, %v90
    %v107 = vmul.f32 %v75, %v91
    %v108 = vmul.f32 %v76, %v92
    %v109 = vmul.f32 %v77, %v93
    %v110 = vmul.f32 %v78, %v94
    %v111 = vmul.f32 %v79, %v95
    %v112 = vmul.f32 %v80, %v96
    %v113 = vmul.f32 %v81, %v97
    %v114 = vmul.f32 %v82, %v98
    %v115 = vmul.f32 %v83, %v99
    %v116 = vld [vmem:[#allocation2] sm:$0xff]
    %v117 = vld [vmem:[#allocation3] sm:$0xff]
    %118 = vmatpush.xpose.msra.mxu0 %v115
    %119 = vmatpush.xpose.msra.mxu0 %v114
    %120 = vmatpush.xpose.msra.mxu0 %v113
    %121 = vmatpush.xpose.msra.mxu0 %v112
    %122 = vmatpush.xpose.msra.mxu0 %v111
    %123 = vmatpush.xpose.msra.mxu0 %v110
    %124 = vmatpush.xpose.msra.mxu0 %v109
    %125 = vmatpush.xpose.msra.mxu0 %v108
    %126 = vmatpush.xpose.msra.mxu0 %v107
    %127 = vmatpush.xpose.msra.mxu0 %v106
    %128 = vmatpush.xpose.msra.mxu0 %v105
    %129 = vmatpush.xpose.msra.mxu0 %v104
    %130 = vmatpush.xpose.msra.mxu0 %v103
    %131 = vmatpush.xpose.msra.mxu0 %v102
    %132 = vmatpush.xpose.msra.mxu0 %v101
    %133 = vmatpush.xpose.msra.mxu0 %v100
    %134 = vmatmul.f32.gmra.mxu0 %v117
    %v135 = vpop.f32.mrf.mxu0
    %v136 = vadd.f32 0.0, %v135
    %137 = vdwg.mxu0
    %v138 = vadd.f32 %v116, %v136
    %139 = vst [vmem:[#allocation2] sm:$0xff] %v138
    // Predicated region
    $region34: #{tpu_custom_call.1} parent=1 // pred_check
      %p140 = pneg %p63
    $region35: #{tpu_custom_call.1} parent=1 // pred_check_branch
      %142 = sbr.rel (%p140) target = $region37
    $region36: #{tpu_custom_call.1} parent=1 // pred_region
      %v143 = vld [vmem:[#allocation2] sm:$0xff]
      %v144 = vld [vmem:[%s3] sm:$0x1]
      %v146 = vperm.slane %v144, 0
      %v148 = vadd.f32 %v143, %v146
      %149 = vst [vmem:[#allocation9] sm:$0xff] %v148
    $region37: #{tpu_custom_call.1} parent=1 // pred_fallthru
      _
    // Predicated region
    $region38: #{tpu_custom_call.1} parent=1 // pred_check
      _
    $region39: #{tpu_custom_call.1} parent=1 // pred_check_branch
      %151 = sbr.rel (0) target = $region41
    $region40: #{tpu_custom_call.1} parent=1 // pred_region
      %153 = vsyncadd [#allocation5], 0
      %s155 = sshll.u32 [#allocation9], 4
      %s156 = int_to_ptr.vmem [resolvable:$true] %s155
      %s157 = sshll.u32 %s4, 4
      %s158 = int_to_ptr.hbm [resolvable:$true] %s157
      %160 = dma.vmem_to_hbm [thread:$0]  %s156, 128, %s158, [#allocation5]
    $region41: #{tpu_custom_call.1} parent=1 // pred_fallthru
      _
    // Predicated region
    $region42: #{tpu_custom_call.1} parent=1 // pred_check
      _
    $region43: #{tpu_custom_call.1} parent=1 // pred_check_branch
      %162 = sbr.rel (0) target = $region45
    $region44: #{tpu_custom_call.1} parent=1 // pred_region
      %164 = dma.done [#allocation5], 128
    $region45: #{tpu_custom_call.1} parent=1 // pred_fallthru
      _
    %165 = vsyncpa [#allocation4], 1
    %166 = vsyncpa [#allocation7], 1
    %167 = vsyncpa [#allocation5], 1

</llo_original>
